<compile_context>
chip_gen: v5e
topology: v5e:2x2
jax: 0.10.0
libtpu: 0.0.40
codegen_flags: <defaults>
</compile_context>

<pallas_src>
import functools

import jax
import jax.numpy as jnp
from jax import lax
from jax.experimental import pallas as pl
from jax.experimental.pallas import tpu as pltpu


def _msa_kernel(x_ref, wqkv_ref, bqkv_ref, wo_ref, bo_ref,
                attn_ref, weight_ref, qkv_ref, ctx_ref, *, num_heads):
    Bblk, N, E = x_ref.shape
    H = num_heads
    D = E // H

    # ---- Fused QKV projection: one (Bblk*N, E) @ (E, 3E) MXU call. ----
    # (1/sqrt(E) already folded into the Q third of wqkv/bqkv by the wrapper.)
    x2d = x_ref[...].reshape(Bblk * N, E).astype(jnp.bfloat16)
    qkv = jnp.dot(x2d, wqkv_ref[...], preferred_element_type=jnp.float32) + bqkv_ref[...]
    qkv_ref[...] = qkv.astype(qkv_ref.dtype)

    # Contract last axis of both operands: q @ k^T without materializing a transpose.
    dn = (((1,), (1,)), ((), ()))

    for b in range(Bblk):                                   # static; Bblk is small
        rows = slice(b * N, (b + 1) * N)

        # Pass 1: per-head scores, staged directly in the weight output block,
        # while tracking the running max over the HEAD axis (torch softmax dim=1).
        m = None
        for h in range(H):
            qh = qkv_ref[rows, h * D:(h + 1) * D]                       # (N, D) bf16
            kh = qkv_ref[rows, E + h * D:E + (h + 1) * D]               # (N, D) bf16
            s = lax.dot_general(qh, kh, dimension_numbers=dn,
                                preferred_element_type=jnp.float32)     # (N, N) f32
            weight_ref[b, h] = s
            m = s if m is None else jnp.maximum(m, s)

        # Pass 2: exponentiate in place; accumulate the head-axis denominator.
        denom = None
        for h in range(H):
            e = jnp.exp(weight_ref[b, h] - m)
            weight_ref[b, h] = e
            denom = e if denom is None else denom + e
        inv_denom = 1.0 / denom          # exact: returned weights sum to 1 over heads

        # Pass 3: normalize (softmax over the HEAD axis) and apply to V per head.
        for h in range(H):
            w_h = weight_ref[b, h] * inv_denom                          # (N, N) f32
            weight_ref[b, h] = w_h
            vh = qkv_ref[rows, 2 * E + h * D:2 * E + (h + 1) * D]       # (N, D) bf16
            ctx_ref[rows, h * D:(h + 1) * D] = jnp.dot(
                w_h.astype(jnp.bfloat16), vh,
                preferred_element_type=jnp.float32).astype(ctx_ref.dtype)

    # ---- Output projection over all rows of the block at once. ----
    out = (jnp.dot(ctx_ref[...], wo_ref[...], preferred_element_type=jnp.float32)
           + bo_ref[...])
    attn_ref[...] = out.reshape(Bblk, N, E).astype(attn_ref.dtype)


def msa_forward(x, params, num_heads, batch_block=None):
    """x: (B, N, E) float32.  Returns (attention (B,N,E), weight (B,H,N,N))."""
    B, N, E = x.shape
    H = num_heads
    assert E % H == 0, "embed_dim must be divisible by num_heads"
    wq, bq, wk, bk, wv, bv, wo, bo = params

    scale = 1.0 / (E ** 0.5)
    # Fuse Q/K/V projections and fold the 1/sqrt(embed_dim) score scale into the Q third.
    # MXU weights stored bf16 (half the DMA/VMEM); biases stay f32 (added to f32 accumulator).
    wqkv = jnp.concatenate([wq * scale, wk, wv], axis=1).astype(jnp.bfloat16)   # (E, 3E)
    bqkv = jnp.concatenate([bq * scale, bk, bv], axis=1)                        # (1, 3E) f32
    wo_bf = wo.astype(jnp.bfloat16)

    if batch_block is None:
        # Target ~256 rows per projection matmul (fills the 256-wide MXU on v6e/v7x), but keep
        # at least 2 grid steps when possible so the "parallel" axis can use both v7x TensorCores.
        cap = max(1, min(B, 256 // max(N, 1)))
        if B > 1:
            cap = min(cap, max(1, B // 2))
        batch_block = next(c for c in range(cap, 0, -1) if B % c == 0)
    assert B % batch_block == 0

    rows = batch_block * N
    const2d = lambda g: (0, 0)
    single = pl.Buffered(1)      # grid-invariant operands: no double buffering

    # VMEM budget: blocks (with their buffer counts) + scratch, +25% headroom, floored at the
    # default scoped limit and capped below physical VMEM.
    f32b, bf16b = 4, 2
    vmem = (rows * E * f32b * 2                         # x block (double-buffered)
            + (E * 3 * E + E * E) * bf16b               # wqkv, wo (single-buffered, bf16)
            + (3 * E + E) * f32b                        # bqkv, bo
            + rows * E * f32b * 2                       # attention output block
            + batch_block * H * N * N * f32b * 2        # weight output block
            + rows * 3 * E * bf16b + rows * E * bf16b)  # qkv / ctx scratch
    vmem_limit = int(min(max(vmem * 1.25, 32 * 1024 * 1024), 128 * 1024 * 1024))

    kernel = functools.partial(_msa_kernel, num_heads=H)

    return pl.pallas_call(
        kernel,
        out_shape=(
            jax.ShapeDtypeStruct((B, N, E), x.dtype),
            jax.ShapeDtypeStruct((B, H, N, N), jnp.float32),
        ),
        grid_spec=pltpu.PrefetchScalarGridSpec(
            num_scalar_prefetch=0,
            grid=(B // batch_block,),
            in_specs=[
                pl.BlockSpec((batch_block, N, E), lambda g: (g, 0, 0)),      # x
                pl.BlockSpec((E, 3 * E), const2d, pipeline_mode=single),     # Wqkv (bf16)
                pl.BlockSpec((1, 3 * E), const2d, pipeline_mode=single),     # bqkv
                pl.BlockSpec((E, E), const2d, pipeline_mode=single),         # Wo (bf16)
                pl.BlockSpec((1, E), const2d, pipeline_mode=single),         # bo
            ],
            out_specs=[
                pl.BlockSpec((batch_block, N, E), lambda g: (g, 0, 0)),
                pl.BlockSpec((batch_block, H, N, N), lambda g: (g, 0, 0, 0)),
            ],
            scratch_shapes=[
                pltpu.VMEM((rows, 3 * E), jnp.bfloat16),   # staged QKV (bf16 MXU operands)
                pltpu.VMEM((rows, E), jnp.bfloat16),       # attention context
            ],
        ),
        compiler_params=pltpu.CompilerParams(
            dimension_semantics=("parallel",),
            vmem_limit_bytes=vmem_limit),
    )(x, wqkv, bqkv, wo_bf, bo)


def msa_reference(x, params, num_heads):
    """Pure-JAX (f32) replica of the PyTorch forward, for validation."""
    B, N, E = x.shape
    H = num_heads
    D = E // H
    wq, bq, wk, bk, wv, bv, wo, bo = params

    def split_heads(t):
        return t.reshape(B, N, H, D).transpose(0, 2, 1, 3)   # (B, H, N, D)

    q = split_heads(x @ wq + bq)
    k = split_heads(x @ wk + bk)
    v = split_heads(x @ wv + bv)
    qk = jnp.einsum('bhnd,bhmd->bhnm', q, k) / (E ** 0.5)
    weight = jax.nn.softmax(qk, axis=1)                      # softmax over HEAD axis (torch dim=1)
    attn = jnp.einsum('bhnm,bhmd->bhnd', weight, v)
    attn = attn.transpose(0, 2, 1, 3).reshape(B, N, E)
    attn = attn @ wo + bo
    return attn, weight


def init_params(key, embed_dim):
    E = embed_dim
    ks = jax.random.split(key, 8)
    s = 0.02
    # Weights stored already transposed vs. torch (kernel/reference do x @ W + b).
    wq = s * jax.random.normal(ks[0], (E, E), jnp.float32)
    bq = s * jax.random.normal(ks[1], (1, E), jnp.float32)
    wk = s * jax.random.normal(ks[2], (E, E), jnp.float32)
    bk = s * jax.random.normal(ks[3], (1, E), jnp.float32)
    wv = s * jax.random.normal(ks[4], (E, E), jnp.float32)
    bv = s * jax.random.normal(ks[5], (1, E), jnp.float32)
    wo = s * jax.random.normal(ks[6], (E, E), jnp.float32)
    bo = s * jax.random.normal(ks[7], (1, E), jnp.float32)
    return (wq, bq, wk, bk, wv, bv, wo, bo)


if __name__ == "__main__":
    B, N, E, H = 2, 8, 32, 4   # batch, tokens, embed_dim, num_heads (depth = 8)

    key = jax.random.PRNGKey(0)
    kx, kp = jax.random.split(key)
    x = jax.random.normal(kx, (B, N, E), jnp.float32)
    params = init_params(kp, E)

    attn, weight = msa_forward(x, params, H)
    attn = jax.block_until_ready(attn)
    weight = jax.block_until_ready(weight)

    ref_attn, ref_weight = msa_reference(x, params, H)
    assert attn.shape == (B, N, E) and weight.shape == (B, H, N, N)
    # Tolerance covers bf16 MXU operands (f32 accumulation); softmax reciprocal is exact.
    assert jnp.allclose(attn, ref_attn, atol=2e-2, rtol=2e-2)
    assert jnp.allclose(weight, ref_weight, atol=2e-2, rtol=2e-2)

    print("KERNEL_OK")
</pallas_src>

<mosaic_0001>
module attributes {stable_mosaic.version = 11 : i64} {
  func.func @_msa_kernel(%arg0: i32, %arg1: memref<1x8x32xf32, #tpu.memory_space<vmem>>, %arg2: memref<32x96xbf16, #tpu.memory_space<vmem>>, %arg3: memref<1x96xf32, #tpu.memory_space<vmem>>, %arg4: memref<32x32xbf16, #tpu.memory_space<vmem>>, %arg5: memref<1x32xf32, #tpu.memory_space<vmem>>, %arg6: memref<1x8x32xf32, #tpu.memory_space<vmem>>, %arg7: memref<1x4x8x8xf32, #tpu.memory_space<vmem>>, %arg8: memref<8x96xbf16, #tpu.memory_space<vmem>>, %arg9: memref<8x32xbf16, #tpu.memory_space<vmem>>) attributes {dimension_semantics = [#tpu.dimension_semantics<parallel>], iteration_bounds = array<i64: 2>, scalar_prefetch = 0 : i64, scratch_operands = 2 : i64, tpu.core_type = #tpu.core_type<tc>, window_params = [{transform_indices = @transform_0, window_bounds = array<i64: 1, 8, 32>}, {pipeline_mode = #tpu.pipeline_mode<synchronous>, transform_indices = @transform_1, window_bounds = array<i64: 32, 96>}, {pipeline_mode = #tpu.pipeline_mode<synchronous>, transform_indices = @transform_2, window_bounds = array<i64: 1, 96>}, {pipeline_mode = #tpu.pipeline_mode<synchronous>, transform_indices = @transform_3, window_bounds = array<i64: 32, 32>}, {pipeline_mode = #tpu.pipeline_mode<synchronous>, transform_indices = @transform_4, window_bounds = array<i64: 1, 32>}, {transform_indices = @transform_5, window_bounds = array<i64: 1, 8, 32>}, {transform_indices = @transform_6, window_bounds = array<i64: 1, 4, 8, 8>}]} {
    %c0 = arith.constant 0 : index
    %c0_0 = arith.constant 0 : index
    %c0_1 = arith.constant 0 : index
    %0 = vector.load %arg1[%c0, %c0_0, %c0_1] : memref<1x8x32xf32, #tpu.memory_space<vmem>>, vector<1x8x32xf32>
    %1 = vector.shape_cast %0 : vector<1x8x32xf32> to vector<8x32xf32>
    %2 = arith.truncf %1 : vector<8x32xf32> to vector<8x32xbf16>
    %c0_2 = arith.constant 0 : index
    %c0_3 = arith.constant 0 : index
    %3 = vector.load %arg2[%c0_2, %c0_3] : memref<32x96xbf16, #tpu.memory_space<vmem>>, vector<32x96xbf16>
    %cst = arith.constant dense<0.000000e+00> : vector<8x96xf32>
    %4 = tpu.matmul %2, %3, %cst {dimension_numbers = #tpu.dot_dimension_numbers<[1], [0], [0], [1], [0, 0, 1, 1], [], []>} : vector<8x32xbf16>, vector<32x96xbf16>, vector<8x96xf32> -> vector<8x96xf32>
    %c0_4 = arith.constant 0 : index
    %c0_5 = arith.constant 0 : index
    %5 = vector.load %arg3[%c0_4, %c0_5] : memref<1x96xf32, #tpu.memory_space<vmem>>, vector<1x96xf32>
    %6 = vector.broadcast %5 : vector<1x96xf32> to vector<8x96xf32>
    %7 = arith.addf %4, %6 : vector<8x96xf32>
    %8 = arith.truncf %7 : vector<8x96xf32> to vector<8x96xbf16>
    %c0_6 = arith.constant 0 : index
    %c0_7 = arith.constant 0 : index
    %9 = vector.load %arg8[%c0_6, %c0_7] : memref<8x96xbf16, #tpu.memory_space<vmem>>, vector<8x96xbf16>
    tpu.vector_store %arg8[%c0_6, %c0_7], %8 {strides = array<i32>} : memref<8x96xbf16, #tpu.memory_space<vmem>>, vector<8x96xbf16>,
    %c0_8 = arith.constant 0 : index
    %c0_9 = arith.constant 0 : index
    %10 = vector.load %arg8[%c0_8, %c0_9] : memref<8x96xbf16, #tpu.memory_space<vmem>>, vector<8x8xbf16>
    %c0_10 = arith.constant 0 : index
    %c32 = arith.constant 32 : index
    %11 = vector.load %arg8[%c0_10, %c32] : memref<8x96xbf16, #tpu.memory_space<vmem>>, vector<8x8xbf16>
    %cst_11 = arith.constant dense<0.000000e+00> : vector<8x8xf32>
    %12 = tpu.matmul %10, %11, %cst_11 {dimension_numbers = #tpu.dot_dimension_numbers<[1], [1], [0], [0], [0, 0, 1, 0], [], []>} : vector<8x8xbf16>, vector<8x8xbf16>, vector<8x8xf32> -> vector<8x8xf32>
    %c0_12 = arith.constant 0 : index
    %c0_13 = arith.constant 0 : index
    %c0_14 = arith.constant 0 : index
    %c0_15 = arith.constant 0 : index
    %13 = vector.load %arg7[%c0_12, %c0_13, %c0_14, %c0_15] : memref<1x4x8x8xf32, #tpu.memory_space<vmem>>, vector<1x1x8x8xf32>
    %14 = vector.shape_cast %13 : vector<1x1x8x8xf32> to vector<8x8xf32>
    %15 = vector.shape_cast %12 : vector<8x8xf32> to vector<1x1x8x8xf32>
    tpu.vector_store %arg7[%c0_12, %c0_13, %c0_14, %c0_15], %15 {strides = array<i32>} : memref<1x4x8x8xf32, #tpu.memory_space<vmem>>, vector<1x1x8x8xf32>,
    %c0_16 = arith.constant 0 : index
    %c8 = arith.constant 8 : index
    %16 = vector.load %arg8[%c0_16, %c8] : memref<8x96xbf16, #tpu.memory_space<vmem>>, vector<8x8xbf16>
    %c0_17 = arith.constant 0 : index
    %c40 = arith.constant 40 : index
    %17 = vector.load %arg8[%c0_17, %c40] : memref<8x96xbf16, #tpu.memory_space<vmem>>, vector<8x8xbf16>
    %cst_18 = arith.constant dense<0.000000e+00> : vector<8x8xf32>
    %18 = tpu.matmul %16, %17, %cst_18 {dimension_numbers = #tpu.dot_dimension_numbers<[1], [1], [0], [0], [0, 0, 1, 0], [], []>} : vector<8x8xbf16>, vector<8x8xbf16>, vector<8x8xf32> -> vector<8x8xf32>
    %c0_19 = arith.constant 0 : index
    %c1 = arith.constant 1 : index
    %c0_20 = arith.constant 0 : index
    %c0_21 = arith.constant 0 : index
    %19 = vector.load %arg7[%c0_19, %c1, %c0_20, %c0_21] : memref<1x4x8x8xf32, #tpu.memory_space<vmem>>, vector<1x1x8x8xf32>
    %20 = vector.shape_cast %19 : vector<1x1x8x8xf32> to vector<8x8xf32>
    %21 = vector.shape_cast %18 : vector<8x8xf32> to vector<1x1x8x8xf32>
    tpu.vector_store %arg7[%c0_19, %c1, %c0_20, %c0_21], %21 {strides = array<i32>} : memref<1x4x8x8xf32, #tpu.memory_space<vmem>>, vector<1x1x8x8xf32>,
    %22 = arith.maximumf %12, %18 : vector<8x8xf32>
    %c0_22 = arith.constant 0 : index
    %c16 = arith.constant 16 : index
    %23 = vector.load %arg8[%c0_22, %c16] : memref<8x96xbf16, #tpu.memory_space<vmem>>, vector<8x8xbf16>
    %c0_23 = arith.constant 0 : index
    %c48 = arith.constant 48 : index
    %24 = vector.load %arg8[%c0_23, %c48] : memref<8x96xbf16, #tpu.memory_space<vmem>>, vector<8x8xbf16>
    %cst_24 = arith.constant dense<0.000000e+00> : vector<8x8xf32>
    %25 = tpu.matmul %23, %24, %cst_24 {dimension_numbers = #tpu.dot_dimension_numbers<[1], [1], [0], [0], [0, 0, 1, 0], [], []>} : vector<8x8xbf16>, vector<8x8xbf16>, vector<8x8xf32> -> vector<8x8xf32>
    %c0_25 = arith.constant 0 : index
    %c2 = arith.constant 2 : index
    %c0_26 = arith.constant 0 : index
    %c0_27 = arith.constant 0 : index
    %26 = vector.load %arg7[%c0_25, %c2, %c0_26, %c0_27] : memref<1x4x8x8xf32, #tpu.memory_space<vmem>>, vector<1x1x8x8xf32>
    %27 = vector.shape_cast %26 : vector<1x1x8x8xf32> to vector<8x8xf32>
    %28 = vector.shape_cast %25 : vector<8x8xf32> to vector<1x1x8x8xf32>
    tpu.vector_store %arg7[%c0_25, %c2, %c0_26, %c0_27], %28 {strides = array<i32>} : memref<1x4x8x8xf32, #tpu.memory_space<vmem>>, vector<1x1x8x8xf32>,
    %29 = arith.maximumf %22, %25 : vector<8x8xf32>
    %c0_28 = arith.constant 0 : index
    %c24 = arith.constant 24 : index
    %30 = vector.load %arg8[%c0_28, %c24] : memref<8x96xbf16, #tpu.memory_space<vmem>>, vector<8x8xbf16>
    %c0_29 = arith.constant 0 : index
    %c56 = arith.constant 56 : index
    %31 = vector.load %arg8[%c0_29, %c56] : memref<8x96xbf16, #tpu.memory_space<vmem>>, vector<8x8xbf16>
    %cst_30 = arith.constant dense<0.000000e+00> : vector<8x8xf32>
    %32 = tpu.matmul %30, %31, %cst_30 {dimension_numbers = #tpu.dot_dimension_numbers<[1], [1], [0], [0], [0, 0, 1, 0], [], []>} : vector<8x8xbf16>, vector<8x8xbf16>, vector<8x8xf32> -> vector<8x8xf32>
    %c0_31 = arith.constant 0 : index
    %c3 = arith.constant 3 : index
    %c0_32 = arith.constant 0 : index
    %c0_33 = arith.constant 0 : index
    %33 = vector.load %arg7[%c0_31, %c3, %c0_32, %c0_33] : memref<1x4x8x8xf32, #tpu.memory_space<vmem>>, vector<1x1x8x8xf32>
    %34 = vector.shape_cast %33 : vector<1x1x8x8xf32> to vector<8x8xf32>
    %35 = vector.shape_cast %32 : vector<8x8xf32> to vector<1x1x8x8xf32>
    tpu.vector_store %arg7[%c0_31, %c3, %c0_32, %c0_33], %35 {strides = array<i32>} : memref<1x4x8x8xf32, #tpu.memory_space<vmem>>, vector<1x1x8x8xf32>,
    %36 = arith.maximumf %29, %32 : vector<8x8xf32>
    %c0_34 = arith.constant 0 : index
    %c0_35 = arith.constant 0 : index
    %c0_36 = arith.constant 0 : index
    %c0_37 = arith.constant 0 : index
    %37 = vector.load %arg7[%c0_34, %c0_35, %c0_36, %c0_37] : memref<1x4x8x8xf32, #tpu.memory_space<vmem>>, vector<1x1x8x8xf32>
    %38 = vector.shape_cast %37 : vector<1x1x8x8xf32> to vector<8x8xf32>
    %39 = arith.subf %38, %36 : vector<8x8xf32>
    %40 = math.exp %39 : vector<8x8xf32>
    %c0_38 = arith.constant 0 : index
    %c0_39 = arith.constant 0 : index
    %c0_40 = arith.constant 0 : index
    %c0_41 = arith.constant 0 : index
    %41 = vector.load %arg7[%c0_38, %c0_39, %c0_40, %c0_41] : memref<1x4x8x8xf32, #tpu.memory_space<vmem>>, vector<1x1x8x8xf32>
    %42 = vector.shape_cast %41 : vector<1x1x8x8xf32> to vector<8x8xf32>
    %43 = vector.shape_cast %40 : vector<8x8xf32> to vector<1x1x8x8xf32>
    tpu.vector_store %arg7[%c0_38, %c0_39, %c0_40, %c0_41], %43 {strides = array<i32>} : memref<1x4x8x8xf32, #tpu.memory_space<vmem>>, vector<1x1x8x8xf32>,
    %c0_42 = arith.constant 0 : index
    %c1_43 = arith.constant 1 : index
    %c0_44 = arith.constant 0 : index
    %c0_45 = arith.constant 0 : index
    %44 = vector.load %arg7[%c0_42, %c1_43, %c0_44, %c0_45] : memref<1x4x8x8xf32, #tpu.memory_space<vmem>>, vector<1x1x8x8xf32>
    %45 = vector.shape_cast %44 : vector<1x1x8x8xf32> to vector<8x8xf32>
    %46 = arith.subf %45, %36 : vector<8x8xf32>
    %47 = math.exp %46 : vector<8x8xf32>
    %c0_46 = arith.constant 0 : index
    %c1_47 = arith.constant 1 : index
    %c0_48 = arith.constant 0 : index
    %c0_49 = arith.constant 0 : index
    %48 = vector.load %arg7[%c0_46, %c1_47, %c0_48, %c0_49] : memref<1x4x8x8xf32, #tpu.memory_space<vmem>>, vector<1x1x8x8xf32>
    %49 = vector.shape_cast %48 : vector<1x1x8x8xf32> to vector<8x8xf32>
    %50 = vector.shape_cast %47 : vector<8x8xf32> to vector<1x1x8x8xf32>
    tpu.vector_store %arg7[%c0_46, %c1_47, %c0_48, %c0_49], %50 {strides = array<i32>} : memref<1x4x8x8xf32, #tpu.memory_space<vmem>>, vector<1x1x8x8xf32>,
    %51 = arith.addf %40, %47 : vector<8x8xf32>
    %c0_50 = arith.constant 0 : index
    %c2_51 = arith.constant 2 : index
    %c0_52 = arith.constant 0 : index
    %c0_53 = arith.constant 0 : index
    %52 = vector.load %arg7[%c0_50, %c2_51, %c0_52, %c0_53] : memref<1x4x8x8xf32, #tpu.memory_space<vmem>>, vector<1x1x8x8xf32>
    %53 = vector.shape_cast %52 : vector<1x1x8x8xf32> to vector<8x8xf32>
    %54 = arith.subf %53, %36 : vector<8x8xf32>
    %55 = math.exp %54 : vector<8x8xf32>
    %c0_54 = arith.constant 0 : index
    %c2_55 = arith.constant 2 : index
    %c0_56 = arith.constant 0 : index
    %c0_57 = arith.constant 0 : index
    %56 = vector.load %arg7[%c0_54, %c2_55, %c0_56, %c0_57] : memref<1x4x8x8xf32, #tpu.memory_space<vmem>>, vector<1x1x8x8xf32>
    %57 = vector.shape_cast %56 : vector<1x1x8x8xf32> to vector<8x8xf32>
    %58 = vector.shape_cast %55 : vector<8x8xf32> to vector<1x1x8x8xf32>
    tpu.vector_store %arg7[%c0_54, %c2_55, %c0_56, %c0_57], %58 {strides = array<i32>} : memref<1x4x8x8xf32, #tpu.memory_space<vmem>>, vector<1x1x8x8xf32>,
    %59 = arith.addf %51, %55 : vector<8x8xf32>
    %c0_58 = arith.constant 0 : index
    %c3_59 = arith.constant 3 : index
    %c0_60 = arith.constant 0 : index
    %c0_61 = arith.constant 0 : index
    %60 = vector.load %arg7[%c0_58, %c3_59, %c0_60, %c0_61] : memref<1x4x8x8xf32, #tpu.memory_space<vmem>>, vector<1x1x8x8xf32>
    %61 = vector.shape_cast %60 : vector<1x1x8x8xf32> to vector<8x8xf32>
    %62 = arith.subf %61, %36 : vector<8x8xf32>
    %63 = math.exp %62 : vector<8x8xf32>
    %c0_62 = arith.constant 0 : index
    %c3_63 = arith.constant 3 : index
    %c0_64 = arith.constant 0 : index
    %c0_65 = arith.constant 0 : index
    %64 = vector.load %arg7[%c0_62, %c3_63, %c0_64, %c0_65] : memref<1x4x8x8xf32, #tpu.memory_space<vmem>>, vector<1x1x8x8xf32>
    %65 = vector.shape_cast %64 : vector<1x1x8x8xf32> to vector<8x8xf32>
    %66 = vector.shape_cast %63 : vector<8x8xf32> to vector<1x1x8x8xf32>
    tpu.vector_store %arg7[%c0_62, %c3_63, %c0_64, %c0_65], %66 {strides = array<i32>} : memref<1x4x8x8xf32, #tpu.memory_space<vmem>>, vector<1x1x8x8xf32>,
    %67 = arith.addf %59, %63 : vector<8x8xf32>
    %cst_66 = arith.constant 1.000000e+00 : f32
    %68 = vector.broadcast %cst_66 : f32 to vector<8x8xf32>
    %69 = arith.divf %68, %67 : vector<8x8xf32>
    %c0_67 = arith.constant 0 : index
    %c0_68 = arith.constant 0 : index
    %c0_69 = arith.constant 0 : index
    %c0_70 = arith.constant 0 : index
    %70 = vector.load %arg7[%c0_67, %c0_68, %c0_69, %c0_70] : memref<1x4x8x8xf32, #tpu.memory_space<vmem>>, vector<1x1x8x8xf32>
    %71 = vector.shape_cast %70 : vector<1x1x8x8xf32> to vector<8x8xf32>
    %72 = arith.mulf %71, %69 : vector<8x8xf32>
    %c0_71 = arith.constant 0 : index
    %c0_72 = arith.constant 0 : index
    %c0_73 = arith.constant 0 : index
    %c0_74 = arith.constant 0 : index
    %73 = vector.load %arg7[%c0_71, %c0_72, %c0_73, %c0_74] : memref<1x4x8x8xf32, #tpu.memory_space<vmem>>, vector<1x1x8x8xf32>
    %74 = vector.shape_cast %73 : vector<1x1x8x8xf32> to vector<8x8xf32>
    %75 = vector.shape_cast %72 : vector<8x8xf32> to vector<1x1x8x8xf32>
    tpu.vector_store %arg7[%c0_71, %c0_72, %c0_73, %c0_74], %75 {strides = array<i32>} : memref<1x4x8x8xf32, #tpu.memory_space<vmem>>, vector<1x1x8x8xf32>,
    %c0_75 = arith.constant 0 : index
    %c64 = arith.constant 64 : index
    %76 = vector.load %arg8[%c0_75, %c64] : memref<8x96xbf16, #tpu.memory_space<vmem>>, vector<8x8xbf16>
    %77 = arith.truncf %72 : vector<8x8xf32> to vector<8x8xbf16>
    %cst_76 = arith.constant dense<0.000000e+00> : vector<8x8xf32>
    %78 = tpu.matmul %77, %76, %cst_76 {dimension_numbers = #tpu.dot_dimension_numbers<[1], [0], [0], [1], [0, 0, 1, 1], [], []>} : vector<8x8xbf16>, vector<8x8xbf16>, vector<8x8xf32> -> vector<8x8xf32>
    %79 = arith.truncf %78 : vector<8x8xf32> to vector<8x8xbf16>
    %c0_77 = arith.constant 0 : index
    %c0_78 = arith.constant 0 : index
    %80 = vector.load %arg9[%c0_77, %c0_78] : memref<8x32xbf16, #tpu.memory_space<vmem>>, vector<8x8xbf16>
    tpu.vector_store %arg9[%c0_77, %c0_78], %79 {strides = array<i32>} : memref<8x32xbf16, #tpu.memory_space<vmem>>, vector<8x8xbf16>,
    %c0_79 = arith.constant 0 : index
    %c1_80 = arith.constant 1 : index
    %c0_81 = arith.constant 0 : index
    %c0_82 = arith.constant 0 : index
    %81 = vector.load %arg7[%c0_79, %c1_80, %c0_81, %c0_82] : memref<1x4x8x8xf32, #tpu.memory_space<vmem>>, vector<1x1x8x8xf32>
    %82 = vector.shape_cast %81 : vector<1x1x8x8xf32> to vector<8x8xf32>
    %83 = arith.mulf %82, %69 : vector<8x8xf32>
    %c0_83 = arith.constant 0 : index
    %c1_84 = arith.constant 1 : index
    %c0_85 = arith.constant 0 : index
    %c0_86 = arith.constant 0 : index
    %84 = vector.load %arg7[%c0_83, %c1_84, %c0_85, %c0_86] : memref<1x4x8x8xf32, #tpu.memory_space<vmem>>, vector<1x1x8x8xf32>
    %85 = vector.shape_cast %84 : vector<1x1x8x8xf32> to vector<8x8xf32>
    %86 = vector.shape_cast %83 : vector<8x8xf32> to vector<1x1x8x8xf32>
    tpu.vector_store %arg7[%c0_83, %c1_84, %c0_85, %c0_86], %86 {strides = array<i32>} : memref<1x4x8x8xf32, #tpu.memory_space<vmem>>, vector<1x1x8x8xf32>,
    %c0_87 = arith.constant 0 : index
    %c72 = arith.constant 72 : index
    %87 = vector.load %arg8[%c0_87, %c72] : memref<8x96xbf16, #tpu.memory_space<vmem>>, vector<8x8xbf16>
    %88 = arith.truncf %83 : vector<8x8xf32> to vector<8x8xbf16>
    %cst_88 = arith.constant dense<0.000000e+00> : vector<8x8xf32>
    %89 = tpu.matmul %88, %87, %cst_88 {dimension_numbers = #tpu.dot_dimension_numbers<[1], [0], [0], [1], [0, 0, 1, 1], [], []>} : vector<8x8xbf16>, vector<8x8xbf16>, vector<8x8xf32> -> vector<8x8xf32>
    %90 = arith.truncf %89 : vector<8x8xf32> to vector<8x8xbf16>
    %c0_89 = arith.constant 0 : index
    %c8_90 = arith.constant 8 : index
    %91 = vector.load %arg9[%c0_89, %c8_90] : memref<8x32xbf16, #tpu.memory_space<vmem>>, vector<8x8xbf16>
    tpu.vector_store %arg9[%c0_89, %c8_90], %90 {strides = array<i32>} : memref<8x32xbf16, #tpu.memory_space<vmem>>, vector<8x8xbf16>,
    %c0_91 = arith.constant 0 : index
    %c2_92 = arith.constant 2 : index
    %c0_93 = arith.constant 0 : index
    %c0_94 = arith.constant 0 : index
    %92 = vector.load %arg7[%c0_91, %c2_92, %c0_93, %c0_94] : memref<1x4x8x8xf32, #tpu.memory_space<vmem>>, vector<1x1x8x8xf32>
    %93 = vector.shape_cast %92 : vector<1x1x8x8xf32> to vector<8x8xf32>
    %94 = arith.mulf %93, %69 : vector<8x8xf32>
    %c0_95 = arith.constant 0 : index
    %c2_96 = arith.constant 2 : index
    %c0_97 = arith.constant 0 : index
    %c0_98 = arith.constant 0 : index
    %95 = vector.load %arg7[%c0_95, %c2_96, %c0_97, %c0_98] : memref<1x4x8x8xf32, #tpu.memory_space<vmem>>, vector<1x1x8x8xf32>
    %96 = vector.shape_cast %95 : vector<1x1x8x8xf32> to vector<8x8xf32>
    %97 = vector.shape_cast %94 : vector<8x8xf32> to vector<1x1x8x8xf32>
    tpu.vector_store %arg7[%c0_95, %c2_96, %c0_97, %c0_98], %97 {strides = array<i32>} : memref<1x4x8x8xf32, #tpu.memory_space<vmem>>, vector<1x1x8x8xf32>,
    %c0_99 = arith.constant 0 : index
    %c80 = arith.constant 80 : index
    %98 = vector.load %arg8[%c0_99, %c80] : memref<8x96xbf16, #tpu.memory_space<vmem>>, vector<8x8xbf16>
    %99 = arith.truncf %94 : vector<8x8xf32> to vector<8x8xbf16>
    %cst_100 = arith.constant dense<0.000000e+00> : vector<8x8xf32>
    %100 = tpu.matmul %99, %98, %cst_100 {dimension_numbers = #tpu.dot_dimension_numbers<[1], [0], [0], [1], [0, 0, 1, 1], [], []>} : vector<8x8xbf16>, vector<8x8xbf16>, vector<8x8xf32> -> vector<8x8xf32>
    %101 = arith.truncf %100 : vector<8x8xf32> to vector<8x8xbf16>
    %c0_101 = arith.constant 0 : index
    %c16_102 = arith.constant 16 : index
    %102 = vector.load %arg9[%c0_101, %c16_102] : memref<8x32xbf16, #tpu.memory_space<vmem>>, vector<8x8xbf16>
    tpu.vector_store %arg9[%c0_101, %c16_102], %101 {strides = array<i32>} : memref<8x32xbf16, #tpu.memory_space<vmem>>, vector<8x8xbf16>,
    %c0_103 = arith.constant 0 : index
    %c3_104 = arith.constant 3 : index
    %c0_105 = arith.constant 0 : index
    %c0_106 = arith.constant 0 : index
    %103 = vector.load %arg7[%c0_103, %c3_104, %c0_105, %c0_106] : memref<1x4x8x8xf32, #tpu.memory_space<vmem>>, vector<1x1x8x8xf32>
    %104 = vector.shape_cast %103 : vector<1x1x8x8xf32> to vector<8x8xf32>
    %105 = arith.mulf %104, %69 : vector<8x8xf32>
    %c0_107 = arith.constant 0 : index
    %c3_108 = arith.constant 3 : index
    %c0_109 = arith.constant 0 : index
    %c0_110 = arith.constant 0 : index
    %106 = vector.load %arg7[%c0_107, %c3_108, %c0_109, %c0_110] : memref<1x4x8x8xf32, #tpu.memory_space<vmem>>, vector<1x1x8x8xf32>
    %107 = vector.shape_cast %106 : vector<1x1x8x8xf32> to vector<8x8xf32>
    %108 = vector.shape_cast %105 : vector<8x8xf32> to vector<1x1x8x8xf32>
    tpu.vector_store %arg7[%c0_107, %c3_108, %c0_109, %c0_110], %108 {strides = array<i32>} : memref<1x4x8x8xf32, #tpu.memory_space<vmem>>, vector<1x1x8x8xf32>,
    %c0_111 = arith.constant 0 : index
    %c88 = arith.constant 88 : index
    %109 = vector.load %arg8[%c0_111, %c88] : memref<8x96xbf16, #tpu.memory_space<vmem>>, vector<8x8xbf16>
    %110 = arith.truncf %105 : vector<8x8xf32> to vector<8x8xbf16>
    %cst_112 = arith.constant dense<0.000000e+00> : vector<8x8xf32>
    %111 = tpu.matmul %110, %109, %cst_112 {dimension_numbers = #tpu.dot_dimension_numbers<[1], [0], [0], [1], [0, 0, 1, 1], [], []>} : vector<8x8xbf16>, vector<8x8xbf16>, vector<8x8xf32> -> vector<8x8xf32>
    %112 = arith.truncf %111 : vector<8x8xf32> to vector<8x8xbf16>
    %c0_113 = arith.constant 0 : index
    %c24_114 = arith.constant 24 : index
    %113 = vector.load %arg9[%c0_113, %c24_114] : memref<8x32xbf16, #tpu.memory_space<vmem>>, vector<8x8xbf16>
    tpu.vector_store %arg9[%c0_113, %c24_114], %112 {strides = array<i32>} : memref<8x32xbf16, #tpu.memory_space<vmem>>, vector<8x8xbf16>,
    %c0_115 = arith.constant 0 : index
    %c0_116 = arith.constant 0 : index
    %114 = vector.load %arg9[%c0_115, %c0_116] : memref<8x32xbf16, #tpu.memory_space<vmem>>, vector<8x32xbf16>
    %c0_117 = arith.constant 0 : index
    %c0_118 = arith.constant 0 : index
    %115 = vector.load %arg4[%c0_117, %c0_118] : memref<32x32xbf16, #tpu.memory_space<vmem>>, vector<32x32xbf16>
    %cst_119 = arith.constant dense<0.000000e+00> : vector<8x32xf32>
    %116 = tpu.matmul %114, %115, %cst_119 {dimension_numbers = #tpu.dot_dimension_numbers<[1], [0], [0], [1], [0, 0, 1, 1], [], []>} : vector<8x32xbf16>, vector<32x32xbf16>, vector<8x32xf32> -> vector<8x32xf32>
    %c0_120 = arith.constant 0 : index
    %c0_121 = arith.constant 0 : index
    %117 = vector.load %arg5[%c0_120, %c0_121] : memref<1x32xf32, #tpu.memory_space<vmem>>, vector<1x32xf32>
    %118 = vector.broadcast %117 : vector<1x32xf32> to vector<8x32xf32>
    %119 = arith.addf %116, %118 : vector<8x32xf32>
    %120 = vector.shape_cast %119 : vector<8x32xf32> to vector<1x8x32xf32>
    %c0_122 = arith.constant 0 : index
    %c0_123 = arith.constant 0 : index
    %c0_124 = arith.constant 0 : index
    %121 = vector.load %arg6[%c0_122, %c0_123, %c0_124] : memref<1x8x32xf32, #tpu.memory_space<vmem>>, vector<1x8x32xf32>
    tpu.vector_store %arg6[%c0_122, %c0_123, %c0_124], %120 {strides = array<i32>} : memref<1x8x32xf32, #tpu.memory_space<vmem>>, vector<1x8x32xf32>,
    return
  }
  func.func @transform_0(%arg0: i32) -> (i32, i32, i32) {
    %c0_i32 = arith.constant 0 : i32
    %c0_i32_0 = arith.constant 0 : i32
    %c0_i32_1 = arith.constant 0 : i32
    return %arg0, %c0_i32, %c0_i32_0 : i32, i32, i32
  }
  func.func @transform_1(%arg0: i32) -> (i32, i32) {
    %c0_i32 = arith.constant 0 : i32
    %c0_i32_0 = arith.constant 0 : i32
    %c0_i32_1 = arith.constant 0 : i32
    return %c0_i32, %c0_i32_0 : i32, i32
  }
  func.func @transform_2(%arg0: i32) -> (i32, i32) {
    %c0_i32 = arith.constant 0 : i32
    %c0_i32_0 = arith.constant 0 : i32
    %c0_i32_1 = arith.constant 0 : i32
    return %c0_i32, %c0_i32_0 : i32, i32
  }
  func.func @transform_3(%arg0: i32) -> (i32, i32) {
    %c0_i32 = arith.constant 0 : i32
    %c0_i32_0 = arith.constant 0 : i32
    %c0_i32_1 = arith.constant 0 : i32
    return %c0_i32, %c0_i32_0 : i32, i32
  }
  func.func @transform_4(%arg0: i32) -> (i32, i32) {
    %c0_i32 = arith.constant 0 : i32
    %c0_i32_0 = arith.constant 0 : i32
    %c0_i32_1 = arith.constant 0 : i32
    return %c0_i32, %c0_i32_0 : i32, i32
  }
  func.func @transform_5(%arg0: i32) -> (i32, i32, i32) {
    %c0_i32 = arith.constant 0 : i32
    %c0_i32_0 = arith.constant 0 : i32
    %c0_i32_1 = arith.constant 0 : i32
    return %arg0, %c0_i32, %c0_i32_0 : i32, i32, i32
  }
  func.func @transform_6(%arg0: i32) -> (i32, i32, i32, i32) {
    %c0_i32 = arith.constant 0 : i32
    %c0_i32_0 = arith.constant 0 : i32
    %c0_i32_1 = arith.constant 0 : i32
    %c0_i32_2 = arith.constant 0 : i32
    return %arg0, %c0_i32, %c0_i32_0, %c0_i32_1 : i32, i32, i32, i32
  }
}

</mosaic_0001>

<llo_original>
// kernel: tpu_custom_call.1
$region0: #{tpu_custom_call.1}
  #allocation0 [shape = 'u32[]', space=smem, size = 0x4, offset = 0x4, fixed_abs, tag = 'smem constant byte address 0x4 - core index']
  #allocation1 [shape = 'u32[72,128]{1,0:T(1,128)}', space=vmem, size = 0x9000, scoped, tag = 'internal scratch']
  #allocation2 [shape = 'bf16[8,96]{1,0:T(8,128)(2,1)}', space=vmem, size = 0x800, scoped, tag = 'scratch operand']
  #allocation3 [shape = 'bf16[8,32]{1,0:T(8,128)(2,1)}', space=vmem, size = 0x800, scoped, tag = 'scratch operand']
  %s0 = inlined_call_operand.hbm [shape: f32[2,8,32], index: 0, kind: input, shape index: {}]
  %s1 = inlined_call_operand.hbm [shape: bf16[32,96], index: 1, kind: input, shape index: {}]
  %s2 = inlined_call_operand.vmem [shape: f32[1,96], index: 2, kind: input, shape index: {}]
  %s3 = inlined_call_operand.hbm [shape: bf16[32,32], index: 3, kind: input, shape index: {}]
  %s4 = inlined_call_operand.vmem [shape: f32[1,32], index: 4, kind: input, shape index: {}]
  %s5 = inlined_call_operand.hbm [shape: f32[2,8,32], index: 5, kind: output, shape index: {0}]
  %s6 = inlined_call_operand.hbm [shape: f32[2,4,8,8], index: 6, kind: output, shape index: {1}]
  %7 = xla_tuple %s5, %s6
  %s8 = sld [smem:[#allocation0]]
  $region73: #{tpu_custom_call.1} parent=0
    _
  %s10 = ssub.s32 1, %s8
  %s11 = scalar_select 0, %s10, %s8
  $region1: #{tpu_custom_call.1} parent=0
    #allocation4 [shape = 'u8[8192]{0}', space=vmem, size = 0x2000, scoped, tag = 'input window, operand 0']
    #allocation5 [shape = 's32[2]{0}', space=sflag, size = 0x8, scoped, tag = 'scoped memory for tpu_custom_call.1']
    #allocation6 [shape = 's32[2]{0}', space=sflag, size = 0x8, scoped, tag = 'scoped memory for tpu_custom_call.1']
    #allocation7 [shape = 'u8[8192]{0}', space=vmem, size = 0x2000, scoped, tag = 'input window, operand 1, single buffered']
    #allocation8 [shape = 's32[1]{0}', space=sflag, size = 0x4, scoped, tag = 'scoped memory for tpu_custom_call.1']
    #allocation9 [shape = 'u8[8192]{0}', space=vmem, size = 0x2000, scoped, tag = 'input window, operand 3, single buffered']
    #allocation10 [shape = 'u8[8192]{0}', space=vmem, size = 0x2000, scoped, tag = 'output window, operand 0']
    #allocation11 [shape = 'u8[32768]{0}', space=vmem, size = 0x8000, scoped, tag = 'output window, operand 1']
    #allocation12 [shape = 's32[2]{0}', space=sflag, size = 0x8, scoped, tag = 'scoped memory for tpu_custom_call.1']
    %12 = vsyncpa [#allocation5], 0
    %s13 = scalar_lea.sflag [#allocation5], 1
    %14 = vsyncpa %s13, 0
    %15 = vsyncpa [#allocation8], 0
    %16 = vsyncpa [#allocation6], 0
    %s17 = scalar_lea.sflag [#allocation6], 1
    %18 = vsyncpa %s17, 0
    %19 = vsyncpa [#allocation12], 0
    %s20 = scalar_lea.sflag [#allocation12], 1
    %21 = vsyncpa %s20, 0
    loop: start=0, step=1, limit=4
    $region2: #{tpu_custom_call.1} parent=1 // loop_pre_header
      _
    $region3: #{tpu_custom_call.1} parent=1 // loop_header
      %s23 = sphi 0, %s27
      %p24 = scmp.ge.s32.totalorder %s23, 4
      %s33 = sphi 0, %s35
      %s36 = sphi 0, %s33
      %s37 = sphi 0, %s36
      %s53 = sphi 0, %s37
      %s57 = sphi 0, %s57
      %s59 = sphi 0, %s57
      %s60 = sphi 0, %s59
      %s74 = sphi 0, %s60
      %s78 = sphi 0, %s78
      %s80 = sphi 0, %s78
      %s81 = sphi 0, %s80
      %s95 = sphi 0, %s81
      %s99 = sphi 0, %s99
      %s101 = sphi 0, %s99
      %s102 = sphi 0, %s101
      %s116 = sphi 0, %s102
      %s120 = sphi 0, %s120
      %s122 = sphi 0, %s120
      %s123 = sphi 0, %s122
      %s137 = sphi 0, %s123
      %s143 = sphi 0, %s145
      %s146 = sphi 0, %s143
      %s147 = sphi 0, %s146
      %s163 = sphi 0, %s147
      %s169 = sphi 0, %s171
      %s172 = sphi 0, %s169
      %s173 = sphi 0, %s172
      %s189 = sphi 0, %s173
    $region4: #{tpu_custom_call.1} parent=1 // loop_header_branch
      %26 = sbr.rel (%p24) target = $region8
    $region5: #{tpu_custom_call.1} parent=1 // loop_body
      %s28 = ssub.s32 %s23, 1
      %s29 = ssub.s32 %s23, 2
      %s30 = sadd.s32 %s23, 1
      %s31 = ssub.s32 %s23, %s30
      %p32 = scmp.eq.s32.totalorder %s31, 0
      %s34 = sadd.s32 %s33, 1
      %s35 = scalar_select %p32, %s33, %s34
      %p38 = pneg %p32
      %p39 = scmp.eq.s32.totalorder %s23, 1
      %p40 = por %p38, %p39
      %p41 = scmp.ne.s32.totalorder %s33, %s36
      %p42 = scmp.eq.s32.totalorder %s23, 0
      %p43 = por %p41, %p42
      %p44 = scmp.ne.s32.totalorder %s33, %s36
      %p45 = scmp.eq.s32.totalorder %s28, 1
      %p46 = por %p44, %p45
      %p47 = scmp.ne.s32.totalorder %s36, %s37
      %p48 = scmp.eq.s32.totalorder %s28, 0
      %p49 = por %p47, %p48
      %p50 = scmp.ne.s32.totalorder %s36, %s37
      %p51 = scmp.eq.s32.totalorder %s29, 1
      %p52 = por %p50, %p51
      %p54 = scmp.ne.s32.totalorder %s37, %s53
      %p55 = scmp.eq.s32.totalorder %s29, 0
      %p56 = por %p54, %p55
      %s58 = sadd.s32 %s57, 1
      %p61 = scmp.eq.s32.totalorder %s23, 1
      %p62 = scmp.ne.s32.totalorder %s57, %s59
      %p63 = scmp.eq.s32.totalorder %s23, 0
      %p64 = por %p62, %p63
      %p65 = scmp.ne.s32.totalorder %s57, %s59
      %p66 = scmp.eq.s32.totalorder %s28, 1
      %p67 = por %p65, %p66
      %p68 = scmp.ne.s32.totalorder %s59, %s60
      %p69 = scmp.eq.s32.totalorder %s28, 0
      %p70 = por %p68, %p69
      %p71 = scmp.ne.s32.totalorder %s59, %s60
      %p72 = scmp.eq.s32.totalorder %s29, 1
      %p73 = por %p71, %p72
      %p75 = scmp.ne.s32.totalorder %s60, %s74
      %p76 = scmp.eq.s32.totalorder %s29, 0
      %p77 = por %p75, %p76
      %s79 = sadd.s32 %s78, 1
      %p82 = scmp.eq.s32.totalorder %s23, 1
      %p83 = scmp.ne.s32.totalorder %s78, %s80
      %p84 = scmp.eq.s32.totalorder %s23, 0
      %p85 = por %p83, %p84
      %p86 = scmp.ne.s32.totalorder %s78, %s80
      %p87 = scmp.eq.s32.totalorder %s28, 1
      %p88 = por %p86, %p87
      %p89 = scmp.ne.s32.totalorder %s80, %s81
      %p90 = scmp.eq.s32.totalorder %s28, 0
      %p91 = por %p89, %p90
      %p92 = scmp.ne.s32.totalorder %s80, %s81
      %p93 = scmp.eq.s32.totalorder %s29, 1
      %p94 = por %p92, %p93
      %p96 = scmp.ne.s32.totalorder %s81, %s95
      %p97 = scmp.eq.s32.totalorder %s29, 0
      %p98 = por %p96, %p97
      %s100 = sadd.s32 %s99, 1
      %p103 = scmp.eq.s32.totalorder %s23, 1
      %p104 = scmp.ne.s32.totalorder %s99, %s101
      %p105 = scmp.eq.s32.totalorder %s23, 0
      %p106 = por %p104, %p105
      %p107 = scmp.ne.s32.totalorder %s99, %s101
      %p108 = scmp.eq.s32.totalorder %s28, 1
      %p109 = por %p107, %p108
      %p110 = scmp.ne.s32.totalorder %s101, %s102
      %p111 = scmp.eq.s32.totalorder %s28, 0
      %p112 = por %p110, %p111
      %p113 = scmp.ne.s32.totalorder %s101, %s102
      %p114 = scmp.eq.s32.totalorder %s29, 1
      %p115 = por %p113, %p114
      %p117 = scmp.ne.s32.totalorder %s102, %s116
      %p118 = scmp.eq.s32.totalorder %s29, 0
      %p119 = por %p117, %p118
      %s121 = sadd.s32 %s120, 1
      %p124 = scmp.eq.s32.totalorder %s23, 1
      %p125 = scmp.ne.s32.totalorder %s120, %s122
      %p126 = scmp.eq.s32.totalorder %s23, 0
      %p127 = por %p125, %p126
      %p128 = scmp.ne.s32.totalorder %s120, %s122
      %p129 = scmp.eq.s32.totalorder %s28, 1
      %p130 = por %p128, %p129
      %p131 = scmp.ne.s32.totalorder %s122, %s123
      %p132 = scmp.eq.s32.totalorder %s28, 0
      %p133 = por %p131, %p132
      %p134 = scmp.ne.s32.totalorder %s122, %s123
      %p135 = scmp.eq.s32.totalorder %s29, 1
      %p136 = por %p134, %p135
      %p138 = scmp.ne.s32.totalorder %s123, %s137
      %p139 = scmp.eq.s32.totalorder %s29, 0
      %p140 = por %p138, %p139
      %s141 = ssub.s32 %s23, %s30
      %p142 = scmp.eq.s32.totalorder %s141, 0
      %s144 = sadd.s32 %s143, 1
      %s145 = scalar_select %p142, %s143, %s144
      %p148 = pneg %p142
      %p149 = scmp.eq.s32.totalorder %s23, 1
      %p150 = por %p148, %p149
      %p151 = scmp.ne.s32.totalorder %s143, %s146
      %p152 = scmp.eq.s32.totalorder %s23, 0
      %p153 = por %p151, %p152
      %p154 = scmp.ne.s32.totalorder %s143, %s146
      %p155 = scmp.eq.s32.totalorder %s28, 1
      %p156 = por %p154, %p155
      %p157 = scmp.ne.s32.totalorder %s146, %s147
      %p158 = scmp.eq.s32.totalorder %s28, 0
      %p159 = por %p157, %p158
      %p160 = scmp.ne.s32.totalorder %s146, %s147
      %p161 = scmp.eq.s32.totalorder %s29, 1
      %p162 = por %p160, %p161
      %p164 = scmp.ne.s32.totalorder %s147, %s163
      %p165 = scmp.eq.s32.totalorder %s29, 0
      %p166 = por %p164, %p165
      %s167 = ssub.s32 %s23, %s30
      %p168 = scmp.eq.s32.totalorder %s167, 0
      %s170 = sadd.s32 %s169, 1
      %s171 = scalar_select %p168, %s169, %s170
      %p174 = pneg %p168
      %p175 = scmp.eq.s32.totalorder %s23, 1
      %p176 = por %p174, %p175
      %p177 = scmp.ne.s32.totalorder %s169, %s172
      %p178 = scmp.eq.s32.totalorder %s23, 0
      %p179 = por %p177, %p178
      %p180 = scmp.ne.s32.totalorder %s169, %s172
      %p181 = scmp.eq.s32.totalorder %s28, 1
      %p182 = por %p180, %p181
      %p183 = scmp.ne.s32.totalorder %s172, %s173
      %p184 = scmp.eq.s32.totalorder %s28, 0
      %p185 = por %p183, %p184
      %p186 = scmp.ne.s32.totalorder %s172, %s173
      %p187 = scmp.eq.s32.totalorder %s29, 1
      %p188 = por %p186, %p187
      %p190 = scmp.ne.s32.totalorder %s173, %s189
      %p191 = scmp.eq.s32.totalorder %s29, 0
      %p192 = por %p190, %p191
      %p193 = scmp.le.s32.totalorder 1, %s23
      %p194 = scmp.lt.s32.totalorder %s23, 3
      %p195 = pnand %p193, %p194
      %p196 = pneg %p195
      // Predicated region
      $region9: #{tpu_custom_call.1} parent=5 // pred_check
        _
      $region10: #{tpu_custom_call.1} parent=5 // pred_check_branch
        %198 = sbr.rel (%p195) target = $region12
      $region11: #{tpu_custom_call.1} parent=5 // pred_region
        %s199 = ssub.s32 %s23, 1
        // Predicated region
        $region13: #{tpu_custom_call.1} parent=11 // pred_check
          %p200 = pneg %p70
        $region14: #{tpu_custom_call.1} parent=11 // pred_check_branch
          %202 = sbr.rel (%p200) target = $region16
        $region15: #{tpu_custom_call.1} parent=11 // pred_region
          %204 = vsyncadd [#allocation8], 0
          %s205 = sshll.u32 %s1, 4
          %s206 = int_to_ptr.hbm [resolvable:$true] %s205
          %s207 = sshll.u32 [#allocation7], 4
          %s208 = int_to_ptr.vmem [resolvable:$true] %s207
          %213 = dma.hbm_to_vmem [thread:$0]  %s206, 256, %s208, [#allocation8], 64, 64, 4
        $region16: #{tpu_custom_call.1} parent=11 // pred_fallthru
          _
        // Predicated region
        $region17: #{tpu_custom_call.1} parent=11 // pred_check
          %p214 = pneg %p91
        $region18: #{tpu_custom_call.1} parent=11 // pred_check_branch
          %216 = sbr.rel (%p214) target = $region20
        $region19: #{tpu_custom_call.1} parent=11 // pred_region
          _
        $region20: #{tpu_custom_call.1} parent=11 // pred_fallthru
          _
        // Predicated region
        $region21: #{tpu_custom_call.1} parent=11 // pred_check
          %p217 = pneg %p112
        $region22: #{tpu_custom_call.1} parent=11 // pred_check_branch
          %219 = sbr.rel (%p217) target = $region24
        $region23: #{tpu_custom_call.1} parent=11 // pred_region
          %221 = vsyncadd [#allocation8], 0
          %s222 = sshll.u32 %s3, 4
          %s223 = int_to_ptr.hbm [resolvable:$true] %s222
          %s224 = sshll.u32 [#allocation9], 4
          %s225 = int_to_ptr.vmem [resolvable:$true] %s224
          %230 = dma.hbm_to_vmem [thread:$0]  %s223, 256, %s225, [#allocation8], 64, 64, 4
        $region24: #{tpu_custom_call.1} parent=11 // pred_fallthru
          _
        // Predicated region
        $region25: #{tpu_custom_call.1} parent=11 // pred_check
          %p231 = pneg %p133
        $region26: #{tpu_custom_call.1} parent=11 // pred_check_branch
          %233 = sbr.rel (%p231) target = $region28
        $region27: #{tpu_custom_call.1} parent=11 // pred_region
          _
        $region28: #{tpu_custom_call.1} parent=11 // pred_fallthru
          _
      $region12: #{tpu_custom_call.1} parent=5 // pred_fallthru
        _
      %p234 = scmp.lt.s32.totalorder %s23, 2
      // Predicated region
      $region29: #{tpu_custom_call.1} parent=5 // pred_check
        %p235 = pneg %p234
      $region30: #{tpu_custom_call.1} parent=5 // pred_check_branch
        %237 = sbr.rel (%p235) target = $region32
      $region31: #{tpu_custom_call.1} parent=5 // pred_region
        // Predicated region
        $region33: #{tpu_custom_call.1} parent=31 // pred_check
          %p238 = pneg %p43
        $region34: #{tpu_custom_call.1} parent=31 // pred_check_branch
          %240 = sbr.rel (%p238) target = $region36
        $region35: #{tpu_custom_call.1} parent=31 // pred_region
          %s241 = sand.u32 %s33, 1
          %s242 = scalar_lea.sflag [#allocation5], %s241
          %s243 = sand.u32 %s33, 1
          %s244 = smul.addr %s243, 8
          %s245 = scalar_lea.vmem [#allocation4], %s244
          %247 = vsyncadd %s242, 0
          %s248 = smul.addr %s23, 8
          %s249 = scalar_lea.hbm %s0, %s248
          %s251 = sshll.u32 %s249, 4
          %s252 = int_to_ptr.hbm [resolvable:$true] %s251
          %s253 = sshll.u32 %s245, 4
          %s254 = int_to_ptr.vmem [resolvable:$true] %s253
          %256 = dma.hbm_to_vmem [thread:$0]  %s252, 128, %s254, %s242
        $region36: #{tpu_custom_call.1} parent=31 // pred_fallthru
          _
      $region32: #{tpu_custom_call.1} parent=5 // pred_fallthru
        _
      %p257 = scmp.le.s32.totalorder 1, %s23
      %p258 = scmp.lt.s32.totalorder %s23, 3
      %p259 = pnand %p257, %p258
      %p260 = pneg %p259
      // Predicated region
      $region37: #{tpu_custom_call.1} parent=5 // pred_check
        _
      $region38: #{tpu_custom_call.1} parent=5 // pred_check_branch
        %262 = sbr.rel (%p259) target = $region40
      $region39: #{tpu_custom_call.1} parent=5 // pred_region
        %s263 = ssub.s32 %s23, 1
        %s264 = sand.u32 %s36, 1
        %s265 = scalar_lea.sflag [#allocation5], %s264
        %s266 = sand.u32 %s36, 1
        %s267 = smul.addr %s266, 8
        %s268 = scalar_lea.vmem [#allocation4], %s267
        // Predicated region
        $region41: #{tpu_custom_call.1} parent=39 // pred_check
          %p269 = pneg %p49
        $region42: #{tpu_custom_call.1} parent=39 // pred_check_branch
          %271 = sbr.rel (%p269) target = $region44
        $region43: #{tpu_custom_call.1} parent=39 // pred_region
          %273 = dma.done %s265, 128
        $region44: #{tpu_custom_call.1} parent=39 // pred_fallthru
          _
        // Predicated region
        $region45: #{tpu_custom_call.1} parent=39 // pred_check
          %p274 = pneg %p70
        $region46: #{tpu_custom_call.1} parent=39 // pred_check_branch
          %276 = sbr.rel (%p274) target = $region48
        $region47: #{tpu_custom_call.1} parent=39 // pred_region
          %278 = dma.done [#allocation8], 256
        $region48: #{tpu_custom_call.1} parent=39 // pred_fallthru
          _
        // Predicated region
        $region49: #{tpu_custom_call.1} parent=39 // pred_check
          %p279 = pneg %p112
        $region50: #{tpu_custom_call.1} parent=39 // pred_check_branch
          %281 = sbr.rel (%p279) target = $region52
        $region51: #{tpu_custom_call.1} parent=39 // pred_region
          %283 = dma.done [#allocation8], 256
        $region52: #{tpu_custom_call.1} parent=39 // pred_fallthru
          _
        %s284 = sand.u32 %s36, 1
        %s285 = scalar_lea.sflag [#allocation5], %s284
        %s286 = sand.u32 %s36, 1
        %s287 = smul.addr %s286, 8
        %s288 = scalar_lea.vmem [#allocation4], %s287
        %p289 = pneg %p49
        %p290 = pneg %p46
        %p291 = pneg %p70
        %p292 = pneg %p67
        %p293 = pneg %p91
        %p294 = pneg %p88
        %p295 = pneg %p112
        %p296 = pneg %p109
        %p297 = pneg %p133
        %p298 = pneg %p130
        %p299 = pneg %p159
        %p300 = pneg %p156
        %s301 = sand.u32 %s146, 1
        %s302 = scalar_lea.sflag [#allocation6], %s301
        %s303 = sand.u32 %s146, 1
        %s304 = smul.addr %s303, 8
        %s305 = scalar_lea.vmem [#allocation10], %s304
        %p306 = pneg %p185
        %p307 = pneg %p182
        %s308 = sand.u32 %s172, 1
        %s309 = scalar_lea.sflag [#allocation12], %s308
        %s310 = sand.u32 %s172, 1
        %s311 = smul.addr %s310, 32
        %s312 = scalar_lea.vmem [#allocation11], %s311
        %v314 = vld [vmem:[%s268] sm:$0xff]
        %v315 = vpack.c.bf16 %v314, %v314
        %v316 = vld [vmem:[#allocation7] sm:$0xf]
        %v317 = vld [vmem:[#allocation7 + $0x4] sm:$0xf]
        %v318 = vld [vmem:[#allocation7 + $0x8] sm:$0xf]
        %v319 = vld [vmem:[#allocation7 + $0xc] sm:$0xf]
        %v320 = vld [vmem:[%s2] sm:$0x1]
        %v322 = vperm.slane %v320, 0
        %v328 = vunpack.c.l.b16 %v316
        %v329 = vunpack.c.l.b16 %v317
        %v330 = vunpack.c.l.b16 %v318
        %v331 = vunpack.c.l.b16 %v319
        %v332 = vpack.c.b16 %v329, %v328
        %v333 = vpack.c.b16 %v331, %v330
        %vm336 = vcmask 261120
        %v338 = vsel %vm336, %v315, 0
        %340 = vmatpush.bf16.msra.mxu0 0
        %341 = vmatpush.bf16.msra.mxu0 0
        %342 = vmatpush.bf16.msra.mxu0 0
        %343 = vmatpush.bf16.msra.mxu0 0
        %344 = vmatpush.bf16.msra.mxu0 0
        %345 = vmatpush.bf16.msra.mxu0 0
        %346 = vmatpush.bf16.msra.mxu0 %v333
        %347 = vmatpush.bf16.msra.mxu0 %v332
        %348 = vmatmul.bf16.gmra.mxu0 %v338
        %v349 = vpop.f32.mrf.mxu0
        %v350 = vadd.f32 %v322, %v349
        %v351 = vpop.f32.mrf.mxu0
        %352 = vdwg.mxu0
        %v353 = vpack.c.bf16 %v350, %v350
        %vm354 = vcmask 781312
        %355 = vst.msk [vmem:[#allocation2] sm:$0xf] %vm354, %v353
        %v356 = vld [vmem:[#allocation2] sm:$0xf]
        %v358 = vunpack.c.l.b16 %v356
        %v359 = vpack.c.b16 %v358, %v358
        %360 = vrot.lane.b32.xlu0 %v359, 96
        %v361 = vpop.permute.xlu0 %360
        %vm362 = vcmask 64512
        %v364 = vsel %vm362, %v356, 0
        %v367 = vsel %vm362, %v361, 0
        %369 = vmatpush.bf16.xpose.msra.mxu0 0
        %370 = vmatpush.bf16.xpose.msra.mxu0 0
        %371 = vmatpush.bf16.xpose.msra.mxu0 0
        %372 = vmatpush.bf16.xpose.msra.mxu0 0
        %373 = vmatpush.bf16.xpose.msra.mxu0 0
        %374 = vmatpush.bf16.xpose.msra.mxu0 0
        %375 = vmatpush.bf16.xpose.msra.mxu0 0
        %376 = vmatpush.bf16.xpose.msra.mxu0 %v367
        %377 = vmatmul.bf16.gmra.mxu0 %v364
        %v378 = vpop.f32.mrf.mxu0
        %v379 = vadd.f32 0.0, %v378
        %v380 = vpop.f32.mrf.mxu0
        %381 = vdwg.mxu0
        %382 = vst.msk [vmem:[%s312] sm:$0xff] %vm362, %v379
        %v383 = vld [vmem:[#allocation2] sm:$0xf]
        %v385 = vunpack.c.l.b16 %v383
        %v386 = vpack.c.b16 %v385, %v385
        %387 = vrot.lane.b32.xlu0 %v386, 120
        %v388 = vpop.permute.xlu0 %387
        %389 = vrot.lane.b32.xlu0 %v386, 88
        %v390 = vpop.permute.xlu0 %389
        %v392 = vsel %vm362, %v388, 0
        %v395 = vsel %vm362, %v390, 0
        %397 = vmatpush.bf16.xpose.msra.mxu0 0
        %398 = vmatpush.bf16.xpose.msra.mxu0 0
        %399 = vmatpush.bf16.xpose.msra.mxu0 0
        %400 = vmatpush.bf16.xpose.msra.mxu0 0
        %401 = vmatpush.bf16.xpose.msra.mxu0 0
        %402 = vmatpush.bf16.xpose.msra.mxu0 0
        %403 = vmatpush.bf16.xpose.msra.mxu0 0
        %404 = vmatpush.bf16.xpose.msra.mxu0 %v395
        %405 = vmatmul.bf16.gmra.mxu0 %v392
        %v406 = vpop.f32.mrf.mxu0
        %v407 = vadd.f32 0.0, %v406
        %v408 = vpop.f32.mrf.mxu0
        %409 = vdwg.mxu0
        %s410 = scalar_lea.vmem %s312, 8 [#allocation11]
        %411 = vst.msk [vmem:[%s410] sm:$0xff] %vm362, %v407
        %v412 = vmax.f32 %v379, %v407
        %v413 = vld [vmem:[#allocation2] sm:$0xf]
        %v415 = vunpack.c.l.b16 %v413
        %v416 = vpack.c.b16 %v415, %v415
        %417 = vrot.lane.b32.xlu0 %v416, 112
        %v418 = vpop.permute.xlu0 %417
        %419 = vrot.lane.b32.xlu0 %v416, 80
        %v420 = vpop.permute.xlu0 %419
        %v422 = vsel %vm362, %v418, 0
        %v425 = vsel %vm362, %v420, 0
        %427 = vmatpush.bf16.xpose.msra.mxu0 0
        %428 = vmatpush.bf16.xpose.msra.mxu0 0
        %429 = vmatpush.bf16.xpose.msra.mxu0 0
        %430 = vmatpush.bf16.xpose.msra.mxu0 0
        %431 = vmatpush.bf16.xpose.msra.mxu0 0
        %432 = vmatpush.bf16.xpose.msra.mxu0 0
        %433 = vmatpush.bf16.xpose.msra.mxu0 0
        %434 = vmatpush.bf16.xpose.msra.mxu0 %v425
        %435 = vmatmul.bf16.gmra.mxu0 %v422
        %v436 = vpop.f32.mrf.mxu0
        %v437 = vadd.f32 0.0, %v436
        %v438 = vpop.f32.mrf.mxu0
        %439 = vdwg.mxu0
        %s440 = scalar_lea.vmem %s312, 16 [#allocation11]
        %441 = vst.msk [vmem:[%s440] sm:$0xff] %vm362, %v437
        %v442 = vmax.f32 %v412, %v437
        %v443 = vld [vmem:[#allocation2] sm:$0xf]
        %v445 = vunpack.c.l.b16 %v443
        %v446 = vpack.c.b16 %v445, %v445
        %447 = vrot.lane.b32.xlu0 %v446, 104
        %v448 = vpop.permute.xlu0 %447
        %449 = vrot.lane.b32.xlu0 %v446, 72
        %v450 = vpop.permute.xlu0 %449
        %v452 = vsel %vm362, %v448, 0
        %v455 = vsel %vm362, %v450, 0
        %457 = vmatpush.bf16.xpose.msra.mxu0 0
        %458 = vmatpush.bf16.xpose.msra.mxu0 0
        %459 = vmatpush.bf16.xpose.msra.mxu0 0
        %460 = vmatpush.bf16.xpose.msra.mxu0 0
        %461 = vmatpush.bf16.xpose.msra.mxu0 0
        %462 = vmatpush.bf16.xpose.msra.mxu0 0
        %463 = vmatpush.bf16.xpose.msra.mxu0 0
        %464 = vmatpush.bf16.xpose.msra.mxu0 %v455
        %465 = vmatmul.bf16.gmra.mxu0 %v452
        %v466 = vpop.f32.mrf.mxu0
        %v467 = vadd.f32 0.0, %v466
        %v468 = vpop.f32.mrf.mxu0
        %469 = vdwg.mxu0
        %s470 = scalar_lea.vmem %s312, 24 [#allocation11]
        %471 = vst.msk [vmem:[%s470] sm:$0xff] %vm362, %v467
        %v472 = vmax.f32 %v442, %v467
        %v473 = vld [vmem:[%s312] sm:$0xff]
        %v474 = vsub.f32 %v473, %v472
        %v475 = vmul.f32 %v474, 1.442695
        %v476 = vpow.pop %v475
        %477 = vst.msk [vmem:[%s312] sm:$0xff] %vm362, %v476
        %v478 = vld [vmem:[%s410] sm:$0xff]
        %v479 = vsub.f32 %v478, %v472
        %v480 = vmul.f32 %v479, 1.442695
        %v481 = vpow.pop %v480
        %482 = vst.msk [vmem:[%s410] sm:$0xff] %vm362, %v481
        %v483 = vadd.f32 %v476, %v481
        %v484 = vld [vmem:[%s440] sm:$0xff]
        %v485 = vsub.f32 %v484, %v472
        %v486 = vmul.f32 %v485, 1.442695
        %v487 = vpow.pop %v486
        %488 = vst.msk [vmem:[%s440] sm:$0xff] %vm362, %v487
        %v489 = vadd.f32 %v483, %v487
        %v490 = vld [vmem:[%s470] sm:$0xff]
        %v491 = vsub.f32 %v490, %v472
        %v492 = vmul.f32 %v491, 1.442695
        %v493 = vpow.pop %v492
        %494 = vst.msk [vmem:[%s470] sm:$0xff] %vm362, %v493
        %v495 = vadd.f32 %v489, %v493
        %v496 = vrcp.pop %v495
        %v497 = vmul.f32 %v495, %v496
        %v498 = vsub.f32 1.0, %v497
        %v499 = vmul.f32 %v496, %v498
        %v500 = vadd.f32 %v496, %v499
        %vm501 = vweird.f32 %v495
        %vm502 = vweird.f32 %v496
        %vm503 = vmor %vm501, %vm502
        %v504 = vsel %vm503, %v496, %v500
        %v505 = vand.u32 2147483647, %v495
        %vm506 = vcmp.eq.f32.partialorder %v505, 8.507059e+37
        %v507 = vand.u32 %v495, 2147483648
        %v508 = vor.u32 1.1754944e-38, %v507
        %v509 = vsel %vm506, %v508, %v504
        %v510 = vmul.f32 1.0, %v509
        %v511 = vld [vmem:[%s312] sm:$0xff]
        %v512 = vmul.f32 %v511, %v510
        %513 = vst.msk [vmem:[%s312] sm:$0xff] %vm362, %v512
        %v514 = vld [vmem:[#allocation2] sm:$0xf]
        %v515 = vpack.c.bf16 %v512, %v512
        %v517 = vunpack.c.l.b16 %v514
        %v518 = vpack.c.b16 %v517, %v517
        %519 = vrot.lane.b32.xlu0 %v518, 64
        %v520 = vpop.permute.xlu0 %519
        %v522 = vsel %vm362, %v515, 0
        %vm524 = vcmask 1043456
        %v526 = vsel %vm524, %v520, 0
        %528 = vmatpush.bf16.msra.mxu0 0
        %529 = vmatpush.bf16.msra.mxu0 0
        %530 = vmatpush.bf16.msra.mxu0 0
        %531 = vmatpush.bf16.msra.mxu0 0
        %532 = vmatpush.bf16.msra.mxu0 0
        %533 = vmatpush.bf16.msra.mxu0 0
        %534 = vmatpush.bf16.msra.mxu0 0
        %535 = vmatpush.bf16.msra.mxu0 %v526
        %536 = vmatmul.bf16.gmra.mxu0 %v522
        %v537 = vpop.f32.mrf.mxu0
        %v538 = vadd.f32 0.0, %v537
        %v539 = vpop.f32.mrf.mxu0
        %540 = vdwg.mxu0
        %v541 = vpack.c.bf16 %v538, %v538
        %vm542 = vcmask 60416
        %543 = vst.msk [vmem:[#allocation3] sm:$0xf] %vm542, %v541
        %v544 = vld [vmem:[%s410] sm:$0xff]
        %v545 = vmul.f32 %v544, %v510
        %546 = vst.msk [vmem:[%s410] sm:$0xff] %vm362, %v545
        %v547 = vld [vmem:[#allocation2] sm:$0xf]
        %v548 = vpack.c.bf16 %v545, %v545
        %v550 = vunpack.c.l.b16 %v547
        %v551 = vpack.c.b16 %v550, %v550
        %552 = vrot.lane.b32.xlu0 %v551, 56
        %v553 = vpop.permute.xlu0 %552
        %v555 = vsel %vm362, %v548, 0
        %v558 = vsel %vm524, %v553, 0
        %560 = vmatpush.bf16.msra.mxu0 0
        %561 = vmatpush.bf16.msra.mxu0 0
        %562 = vmatpush.bf16.msra.mxu0 0
        %563 = vmatpush.bf16.msra.mxu0 0
        %564 = vmatpush.bf16.msra.mxu0 0
        %565 = vmatpush.bf16.msra.mxu0 0
        %566 = vmatpush.bf16.msra.mxu0 0
        %567 = vmatpush.bf16.msra.mxu0 %v558
        %568 = vmatmul.bf16.gmra.mxu0 %v555
        %v569 = vpop.f32.mrf.mxu0
        %v570 = vadd.f32 0.0, %v569
        %v571 = vpop.f32.mrf.mxu0
        %572 = vdwg.mxu0
        %v573 = vpack.c.bf16 %v570, %v570
        %575 = vrot.lane.b32.xlu0 %v573, 8
        %v576 = vpop.permute.xlu0 %575
        %vm578 = vcmask 126016
        %579 = vst.msk [vmem:[#allocation3] sm:$0xf] %vm578, %v576
        %v580 = vld [vmem:[%s440] sm:$0xff]
        %v581 = vmul.f32 %v580, %v510
        %582 = vst.msk [vmem:[%s440] sm:$0xff] %vm362, %v581
        %v583 = vld [vmem:[#allocation2] sm:$0xf]
        %v584 = vpack.c.bf16 %v581, %v581
        %v586 = vunpack.c.l.b16 %v583
        %v587 = vpack.c.b16 %v586, %v586
        %588 = vrot.lane.b32.xlu0 %v587, 48
        %v589 = vpop.permute.xlu0 %588
        %v591 = vsel %vm362, %v584, 0
        %v594 = vsel %vm524, %v589, 0
        %596 = vmatpush.bf16.msra.mxu0 0
        %597 = vmatpush.bf16.msra.mxu0 0
        %598 = vmatpush.bf16.msra.mxu0 0
        %599 = vmatpush.bf16.msra.mxu0 0
        %600 = vmatpush.bf16.msra.mxu0 0
        %601 = vmatpush.bf16.msra.mxu0 0
        %602 = vmatpush.bf16.msra.mxu0 0
        %603 = vmatpush.bf16.msra.mxu0 %v594
        %604 = vmatmul.bf16.gmra.mxu0 %v591
        %v605 = vpop.f32.mrf.mxu0
        %v606 = vadd.f32 0.0, %v605
        %v607 = vpop.f32.mrf.mxu0
        %608 = vdwg.mxu0
        %v609 = vpack.c.bf16 %v606, %v606
        %611 = vrot.lane.b32.xlu0 %v609, 16
        %v612 = vpop.permute.xlu0 %611
        %vm614 = vcmask 191616
        %615 = vst.msk [vmem:[#allocation3] sm:$0xf] %vm614, %v612
        %v616 = vld [vmem:[%s470] sm:$0xff]
        %v617 = vmul.f32 %v616, %v510
        %618 = vst.msk [vmem:[%s470] sm:$0xff] %vm362, %v617
        %v619 = vld [vmem:[#allocation2] sm:$0xf]
        %v620 = vpack.c.bf16 %v617, %v617
        %v622 = vunpack.c.l.b16 %v619
        %v623 = vpack.c.b16 %v622, %v622
        %624 = vrot.lane.b32.xlu0 %v623, 40
        %v625 = vpop.permute.xlu0 %624
        %v627 = vsel %vm362, %v620, 0
        %v630 = vsel %vm524, %v625, 0
        %632 = vmatpush.bf16.msra.mxu0 0
        %633 = vmatpush.bf16.msra.mxu0 0
        %634 = vmatpush.bf16.msra.mxu0 0
        %635 = vmatpush.bf16.msra.mxu0 0
        %636 = vmatpush.bf16.msra.mxu0 0
        %637 = vmatpush.bf16.msra.mxu0 0
        %638 = vmatpush.bf16.msra.mxu0 0
        %639 = vmatpush.bf16.msra.mxu0 %v630
        %640 = vmatmul.bf16.gmra.mxu0 %v627
        %v641 = vpop.f32.mrf.mxu0
        %v642 = vadd.f32 0.0, %v641
        %v643 = vpop.f32.mrf.mxu0
        %644 = vdwg.mxu0
        %v645 = vpack.c.bf16 %v642, %v642
        %647 = vrot.lane.b32.xlu0 %v645, 24
        %v648 = vpop.permute.xlu0 %647
        %vm650 = vcmask 257216
        %651 = vst.msk [vmem:[#allocation3] sm:$0xf] %vm650, %v648
        %v652 = vld [vmem:[#allocation3] sm:$0xf]
        %v653 = vld [vmem:[#allocation9] sm:$0xf]
        %v654 = vld [vmem:[#allocation9 + $0x4] sm:$0xf]
        %v655 = vld [vmem:[#allocation9 + $0x8] sm:$0xf]
        %v656 = vld [vmem:[#allocation9 + $0xc] sm:$0xf]
        %v657 = vld [vmem:[%s4] sm:$0x1]
        %v659 = vperm.slane %v657, 0
        %v665 = vunpack.c.l.b16 %v653
        %v666 = vunpack.c.l.b16 %v654
        %v667 = vunpack.c.l.b16 %v655
        %v668 = vunpack.c.l.b16 %v656
        %v669 = vpack.c.b16 %v666, %v665
        %v670 = vpack.c.b16 %v668, %v667
        %v674 = vsel %vm336, %v652, 0
        %676 = vmatpush.bf16.msra.mxu0 0
        %677 = vmatpush.bf16.msra.mxu0 0
        %678 = vmatpush.bf16.msra.mxu0 0
        %679 = vmatpush.bf16.msra.mxu0 0
        %680 = vmatpush.bf16.msra.mxu0 0
        %681 = vmatpush.bf16.msra.mxu0 0
        %682 = vmatpush.bf16.msra.mxu0 %v670
        %683 = vmatpush.bf16.msra.mxu0 %v669
        %684 = vmatmul.bf16.gmra.mxu0 %v674
        %v685 = vpop.f32.mrf.mxu0
        %v686 = vadd.f32 %v659, %v685
        %v687 = vpop.f32.mrf.mxu0
        %688 = vdwg.mxu0
        %689 = vst.msk [vmem:[%s305] sm:$0xff] %vm336, %v686
        %s690 = sand.u32 %s146, 1
        %s691 = scalar_lea.sflag [#allocation6], %s690
        %s692 = sand.u32 %s146, 1
        %s693 = smul.addr %s692, 8
        %s694 = scalar_lea.vmem [#allocation10], %s693
        %s695 = sand.u32 %s172, 1
        %s696 = scalar_lea.sflag [#allocation12], %s695
        %s697 = sand.u32 %s172, 1
        %s698 = smul.addr %s697, 32
        %s699 = scalar_lea.vmem [#allocation11], %s698
        // Predicated region
        $region53: #{tpu_custom_call.1} parent=39 // pred_check
          %p700 = pneg %p156
        $region54: #{tpu_custom_call.1} parent=39 // pred_check_branch
          %702 = sbr.rel (%p700) target = $region56
        $region55: #{tpu_custom_call.1} parent=39 // pred_region
          %704 = vsyncadd %s691, 0
          %s705 = smul.addr %s28, 8
          %s706 = scalar_lea.hbm %s5, %s705
          %s708 = sshll.u32 %s694, 4
          %s709 = int_to_ptr.vmem [resolvable:$true] %s708
          %s710 = sshll.u32 %s706, 4
          %s711 = int_to_ptr.hbm [resolvable:$true] %s710
          %713 = dma.vmem_to_hbm [thread:$0]  %s709, 128, %s711, %s691
        $region56: #{tpu_custom_call.1} parent=39 // pred_fallthru
          _
        // Predicated region
        $region57: #{tpu_custom_call.1} parent=39 // pred_check
          %p714 = pneg %p182
        $region58: #{tpu_custom_call.1} parent=39 // pred_check_branch
          %716 = sbr.rel (%p714) target = $region60
        $region59: #{tpu_custom_call.1} parent=39 // pred_region
          %718 = vsyncadd %s696, 0
          %s719 = smul.addr %s28, 4
          %s720 = smul.addr %s719, 8
          %s721 = scalar_lea.hbm %s6, %s720
          %s722 = sshll.u32 %s699, 4
          %s723 = int_to_ptr.vmem [resolvable:$true] %s722
          %s724 = sshll.u32 %s721, 4
          %s725 = int_to_ptr.hbm [resolvable:$true] %s724
          %730 = dma.vmem_to_hbm [thread:$0]  %s723, 512, %s725, %s696, 128, 128, 8
        $region60: #{tpu_custom_call.1} parent=39 // pred_fallthru
          _
      $region40: #{tpu_custom_call.1} parent=5 // pred_fallthru
        _
      %p731 = scmp.le.s32.totalorder 2, %s23
      // Predicated region
      $region61: #{tpu_custom_call.1} parent=5 // pred_check
        %p732 = pneg %p731
      $region62: #{tpu_custom_call.1} parent=5 // pred_check_branch
        %734 = sbr.rel (%p732) target = $region64
      $region63: #{tpu_custom_call.1} parent=5 // pred_region
        %s735 = ssub.s32 %s23, 2
        // Predicated region
        $region65: #{tpu_custom_call.1} parent=63 // pred_check
          %p736 = pneg %p162
        $region66: #{tpu_custom_call.1} parent=63 // pred_check_branch
          %738 = sbr.rel (%p736) target = $region68
        $region67: #{tpu_custom_call.1} parent=63 // pred_region
          %s739 = sand.u32 %s147, 1
          %s740 = scalar_lea.sflag [#allocation6], %s739
          %s741 = sand.u32 %s147, 1
          %s742 = smul.addr %s741, 8
          %s743 = scalar_lea.vmem [#allocation10], %s742
          %745 = dma.done %s740, 128
        $region68: #{tpu_custom_call.1} parent=63 // pred_fallthru
          _
        // Predicated region
        $region69: #{tpu_custom_call.1} parent=63 // pred_check
          %p746 = pneg %p188
        $region70: #{tpu_custom_call.1} parent=63 // pred_check_branch
          %748 = sbr.rel (%p746) target = $region72
        $region71: #{tpu_custom_call.1} parent=63 // pred_region
          %s749 = sand.u32 %s173, 1
          %s750 = scalar_lea.sflag [#allocation12], %s749
          %s751 = sand.u32 %s173, 1
          %s752 = smul.addr %s751, 32
          %s753 = scalar_lea.vmem [#allocation11], %s752
          %755 = dma.done %s750, 512
        $region72: #{tpu_custom_call.1} parent=63 // pred_fallthru
          _
      $region64: #{tpu_custom_call.1} parent=5 // pred_fallthru
        _
    $region6: #{tpu_custom_call.1} parent=1 // loop_footer
      %s27 = sadd.s32 1, %s23
    $region7: #{tpu_custom_call.1} parent=1 // loop_footer_branch
      %22 = sbr.rel target = $region3
    $region8: #{tpu_custom_call.1} parent=1 // loop_exit
      _
    %756 = vsyncpa [#allocation5], 1
    %s757 = scalar_lea.sflag [#allocation5], 1
    %758 = vsyncpa %s757, 1
    %759 = vsyncpa [#allocation8], 1
    %760 = vsyncpa [#allocation6], 1
    %s761 = scalar_lea.sflag [#allocation6], 1
    %762 = vsyncpa %s761, 1
    %763 = vsyncpa [#allocation12], 1
    %s764 = scalar_lea.sflag [#allocation12], 1
    %765 = vsyncpa %s764, 1

</llo_original>
